<compile_context>
chip_gen: v6e
topology: v6e:2x2x1
jax: 0.10.0
libtpu: 0.0.40
codegen_flags: <defaults>
</compile_context>

<pallas_src>
import jax
import jax.numpy as jnp
from jax.experimental import pallas as pl
from jax.experimental.pallas import tpu as pltpu

# ----------------------------- packed-parameter layout -----------------------
NF_PAD    = 16    # padded feature dim (>= n_features, bf16 sublane tile = 16)
H1        = 256   # per-head hidden 1
H2        = 128   # per-head hidden 2
OUT_LANES = 128   # lane-dense output (mean | std | zero padding)
W_LANES   = 256   # lane width of the packed weight / bias buffers

# weight buffer rows (bf16, [W_ROWS, 256])
OFF_W1M = 0                  # rows [  0,  16): W1 mean  [NF_PAD, 256]
OFF_W1S = 16                 # rows [ 16,  32): W1 std   [NF_PAD, 256]
OFF_W2  = 32                 # rows [ 32, 288): cols 0:128 = W2 mean [256,128], cols 128:256 = W2 std
OFF_W3  = 288                # rows [288, 416): cols 0:128 = W3 mean (lane-padded),
                             #                  cols 128:256 = W3 std (shifted to lanes n_a:2n_a)
W_ROWS  = 416                # multiple of 16 (bf16 sublane packing)

# bias buffer rows (f32, [8, 256])
ROW_B1M = 0                  # b1 mean [256]
ROW_B1S = 1                  # b1 std  [256]
ROW_B2  = 2                  # cols 0:128 = b2 mean, cols 128:256 = b2 std
ROW_B3  = 3                  # cols 0:n_a = b3 mean, cols n_a:2n_a = b3 std (first 128 lanes)
B_ROWS  = 8


# ----------------------------------- kernel ----------------------------------
def actor_kernel(x_ref, w_ref, b_ref, out_ref):
    # activations in bf16 for the MXU, accumulation / bias / ReLU in f32
    x = x_ref[...].astype(jnp.bfloat16)                                  # [bm, 16]

    # ---- layer 1 (per head) ----
    w1m = w_ref[OFF_W1M:OFF_W1M + NF_PAD, :]                             # [16, 256] bf16
    w1s = w_ref[OFF_W1S:OFF_W1S + NF_PAD, :]                             # [16, 256] bf16
    b1m = b_ref[ROW_B1M:ROW_B1M + 1, :]                                  # [1, 256] f32
    b1s = b_ref[ROW_B1S:ROW_B1S + 1, :]
    h1m = jnp.maximum(jnp.dot(x, w1m, preferred_element_type=jnp.float32) + b1m, 0.0)
    h1s = jnp.maximum(jnp.dot(x, w1s, preferred_element_type=jnp.float32) + b1s, 0.0)

    # ---- layer 2 (per head, dense weights) ----
    w2m = w_ref[OFF_W2:OFF_W2 + H1, 0:H2]                                # [256, 128] bf16
    w2s = w_ref[OFF_W2:OFF_W2 + H1, H2:2 * H2]                           # [256, 128] bf16
    b2m = b_ref[ROW_B2:ROW_B2 + 1, 0:H2]                                 # [1, 128] f32
    b2s = b_ref[ROW_B2:ROW_B2 + 1, H2:2 * H2]
    h2m = jnp.maximum(
        jnp.dot(h1m.astype(jnp.bfloat16), w2m, preferred_element_type=jnp.float32) + b2m, 0.0)
    h2s = jnp.maximum(
        jnp.dot(h1s.astype(jnp.bfloat16), w2s, preferred_element_type=jnp.float32) + b2s, 0.0)

    # ---- layer 3 (per head, lane-dense output: mean -> lanes [0,n_a), std -> [n_a,2n_a)) ----
    w3m = w_ref[OFF_W3:OFF_W3 + H2, 0:OUT_LANES]                         # [128, 128] bf16
    w3s = w_ref[OFF_W3:OFF_W3 + H2, OUT_LANES:2 * OUT_LANES]             # [128, 128] bf16
    b3  = b_ref[ROW_B3:ROW_B3 + 1, 0:OUT_LANES]                          # [1, 128] f32
    y = (jnp.dot(h2m.astype(jnp.bfloat16), w3m, preferred_element_type=jnp.float32)
         + jnp.dot(h2s.astype(jnp.bfloat16), w3s, preferred_element_type=jnp.float32)
         + b3)                                                           # [bm, 128] f32

    out_ref[...] = y.astype(out_ref.dtype)


# -------------------------- host-side param handling -------------------------
def init_linear_params(key, in_dim, out_dim):
    """PyTorch nn.Linear default init: U(-1/sqrt(fan_in), 1/sqrt(fan_in))."""
    kw, kb = jax.random.split(key)
    bound = 1.0 / jnp.sqrt(jnp.float32(in_dim))
    w = jax.random.uniform(kw, (in_dim, out_dim), jnp.float32, -bound, bound)  # [in, out]
    b = jax.random.uniform(kb, (1, out_dim), jnp.float32, -bound, bound)
    return w, b


def make_params(key, n_actions, n_features):
    keys = jax.random.split(key, 6)
    p = {}
    # actor mean head: n_features -> 256 -> 128 -> n_actions
    p["wm1"], p["bm1"] = init_linear_params(keys[0], n_features, 256)
    p["wm2"], p["bm2"] = init_linear_params(keys[1], 256, 128)
    p["wm3"], p["bm3"] = init_linear_params(keys[2], 128, n_actions)
    # actor std head: n_features -> 256 -> 128 -> n_actions
    p["ws1"], p["bs1"] = init_linear_params(keys[3], n_features, 256)
    p["ws2"], p["bs2"] = init_linear_params(keys[4], 256, 128)
    p["ws3"], p["bs3"] = init_linear_params(keys[5], 128, n_actions)
    return p


def pack_params(params, n_features, n_actions):
    """Pack weights into one bf16 [416,256] buffer and biases into one f32 [8,256] buffer."""
    assert n_features <= NF_PAD and 2 * n_actions <= OUT_LANES
    W = jnp.zeros((W_ROWS, W_LANES), jnp.float32)
    # layer 1 (per head, dense)
    W = W.at[OFF_W1M:OFF_W1M + n_features, :].set(params["wm1"])
    W = W.at[OFF_W1S:OFF_W1S + n_features, :].set(params["ws1"])
    # layer 2 (per head, dense, side by side in lanes)
    W = W.at[OFF_W2:OFF_W2 + H1, 0:H2].set(params["wm2"])
    W = W.at[OFF_W2:OFF_W2 + H1, H2:2 * H2].set(params["ws2"])
    # layer 3 (per head; std shifted so its output lands in lanes [n_a, 2n_a))
    W = W.at[OFF_W3:OFF_W3 + H2, 0:n_actions].set(params["wm3"])
    W = W.at[OFF_W3:OFF_W3 + H2, OUT_LANES + n_actions:OUT_LANES + 2 * n_actions].set(params["ws3"])

    B = jnp.zeros((B_ROWS, W_LANES), jnp.float32)
    B = B.at[ROW_B1M, :].set(params["bm1"][0])
    B = B.at[ROW_B1S, :].set(params["bs1"][0])
    B = B.at[ROW_B2, 0:H2].set(params["bm2"][0])
    B = B.at[ROW_B2, H2:2 * H2].set(params["bs2"][0])
    B = B.at[ROW_B3, 0:n_actions].set(params["bm3"][0])
    B = B.at[ROW_B3, n_actions:2 * n_actions].set(params["bs3"][0])
    return W.astype(jnp.bfloat16), B


# --------------------------------- wrapper ------------------------------------
def _round_up(n, m):
    return ((n + m - 1) // m) * m


def actor_forward(x, weights, biases, n_actions, *, block_batch=1024):
    batch, nf = x.shape
    assert nf <= NF_PAD
    # pad features to NF_PAD lanes (zero columns; matching weight rows are zero)
    x_p = jnp.zeros((batch, NF_PAD), jnp.float32).at[:, :nf].set(x.astype(jnp.float32))

    b8 = _round_up(batch, 8)
    # ensure >=2 grid steps whenever the padded batch allows, so both v7x
    # TensorCores get work under dimension_semantics=("parallel",)
    bm = min(block_batch, max(8, _round_up(b8 // 2, 8)))
    padded_b = _round_up(b8, bm)
    if padded_b != batch:
        x_p = jnp.pad(x_p, ((0, padded_b - batch), (0, 0)))
    grid = (padded_b // bm,)

    # FLOPs the kernel actually issues (per-head dense dots, lane-padded layer 3)
    flops = 2 * padded_b * (2 * NF_PAD * H1 + 2 * H1 * H2 + 2 * H2 * OUT_LANES)
    bytes_accessed = (int(weights.size) * 2 + int(biases.size) * 4
                      + int(x_p.size) * 4 + padded_b * OUT_LANES * 4)

    out = pl.pallas_call(
        actor_kernel,
        out_shape=jax.ShapeDtypeStruct((padded_b, OUT_LANES), jnp.float32),
        grid=grid,
        in_specs=[
            pl.BlockSpec((bm, NF_PAD), lambda i: (i, 0)),                 # batch block
            pl.BlockSpec(memory_space=pltpu.MemorySpace.VMEM),            # packed weights (bf16)
            pl.BlockSpec(memory_space=pltpu.MemorySpace.VMEM),            # packed biases (f32)
        ],
        out_specs=pl.BlockSpec((bm, OUT_LANES), lambda i: (i, 0)),
        compiler_params=pltpu.CompilerParams(dimension_semantics=("parallel",)),
        cost_estimate=pl.CostEstimate(
            flops=int(flops), transcendentals=0, bytes_accessed=int(bytes_accessed)),
    )(x_p, weights, biases)

    mean = out[:batch, 0:n_actions]
    std = out[:batch, n_actions:2 * n_actions]
    return mean, std


# -------------------------------- reference -----------------------------------
def reference_forward(x, params):
    def lin(h, w, b, relu):
        y = jnp.dot(h, w) + b
        return jnp.maximum(y, 0.0) if relu else y

    m = lin(x, params["wm1"], params["bm1"], True)
    m = lin(m, params["wm2"], params["bm2"], True)
    m = lin(m, params["wm3"], params["bm3"], False)
    s = lin(x, params["ws1"], params["bs1"], True)
    s = lin(s, params["ws2"], params["bs2"], True)
    s = lin(s, params["ws3"], params["bs3"], False)
    return m, s


if __name__ == "__main__":
    n_features = 3   # Pendulum observation dim
    n_actions = 1    # Pendulum action dim
    batch = 8

    key = jax.random.PRNGKey(0)
    kx, kp = jax.random.split(key)
    x = jax.random.normal(kx, (batch, n_features), jnp.float32)
    params = make_params(kp, n_actions, n_features)

    weights, biases = pack_params(params, n_features, n_actions)
    mean, std = actor_forward(x, weights, biases, n_actions)
    jax.block_until_ready((mean, std))

    # Reference uses the same bf16-rounded weights the kernel consumes; the
    # kernel additionally feeds bf16 activations to the MXU, so tolerance is
    # loosened relative to a pure-f32 compare.
    params_q = jax.tree_util.tree_map(
        lambda a: a.astype(jnp.bfloat16).astype(jnp.float32), params)
    mean_r, std_r = reference_forward(x, params_q)

    assert mean.shape == (batch, n_actions) and std.shape == (batch, n_actions)
    assert jnp.allclose(mean, mean_r, atol=2e-2, rtol=2e-2)
    assert jnp.allclose(std, std_r, atol=2e-2, rtol=2e-2)
    print("KERNEL_OK")
</pallas_src>

<mosaic_0001>
module attributes {stable_mosaic.version = 11 : i64} {
  func.func @actor_kernel(%arg0: i32, %arg1: memref<8x16xf32, #tpu.memory_space<vmem>>, %arg2: memref<416x256xbf16, #tpu.memory_space<vmem>>, %arg3: memref<8x256xf32, #tpu.memory_space<vmem>>, %arg4: memref<8x128xf32, #tpu.memory_space<vmem>>) attributes {dimension_semantics = [#tpu.dimension_semantics<parallel>], iteration_bounds = array<i64: 1>, scalar_prefetch = 0 : i64, scratch_operands = 0 : i64, tpu.core_type = #tpu.core_type<tc>, window_params = [{transform_indices = @transform_0, window_bounds = array<i64: 8, 16>}, {pipeline_mode = #tpu.pipeline_mode<synchronous>, transform_indices = @transform_1, window_bounds = array<i64: 416, 256>}, {pipeline_mode = #tpu.pipeline_mode<synchronous>, transform_indices = @transform_2, window_bounds = array<i64: 8, 256>}, {transform_indices = @transform_3, window_bounds = array<i64: 8, 128>}]} {
    %c0 = arith.constant 0 : index
    %c0_0 = arith.constant 0 : index
    %0 = vector.load %arg1[%c0, %c0_0] : memref<8x16xf32, #tpu.memory_space<vmem>>, vector<8x16xf32>
    %1 = arith.truncf %0 : vector<8x16xf32> to vector<8x16xbf16>
    %c0_1 = arith.constant 0 : index
    %c0_2 = arith.constant 0 : index
    %2 = vector.load %arg2[%c0_1, %c0_2] : memref<416x256xbf16, #tpu.memory_space<vmem>>, vector<16x256xbf16>
    %c16 = arith.constant 16 : index
    %c0_3 = arith.constant 0 : index
    %3 = vector.load %arg2[%c16, %c0_3] : memref<416x256xbf16, #tpu.memory_space<vmem>>, vector<16x256xbf16>
    %c0_4 = arith.constant 0 : index
    %c0_5 = arith.constant 0 : index
    %4 = vector.load %arg3[%c0_4, %c0_5] : memref<8x256xf32, #tpu.memory_space<vmem>>, vector<1x256xf32>
    %c1 = arith.constant 1 : index
    %c0_6 = arith.constant 0 : index
    %5 = vector.load %arg3[%c1, %c0_6] : memref<8x256xf32, #tpu.memory_space<vmem>>, vector<1x256xf32>
    %cst = arith.constant dense<0.000000e+00> : vector<8x256xf32>
    %6 = tpu.matmul %1, %2, %cst {dimension_numbers = #tpu.dot_dimension_numbers<[1], [0], [0], [1], [0, 0, 1, 1], [], []>} : vector<8x16xbf16>, vector<16x256xbf16>, vector<8x256xf32> -> vector<8x256xf32>
    %7 = vector.broadcast %4 : vector<1x256xf32> to vector<8x256xf32>
    %8 = arith.addf %6, %7 : vector<8x256xf32>
    %cst_7 = arith.constant 0.000000e+00 : f32
    %9 = vector.broadcast %cst_7 : f32 to vector<8x256xf32>
    %10 = arith.maximumf %8, %9 : vector<8x256xf32>
    %cst_8 = arith.constant dense<0.000000e+00> : vector<8x256xf32>
    %11 = tpu.matmul %1, %3, %cst_8 {dimension_numbers = #tpu.dot_dimension_numbers<[1], [0], [0], [1], [0, 0, 1, 1], [], []>} : vector<8x16xbf16>, vector<16x256xbf16>, vector<8x256xf32> -> vector<8x256xf32>
    %12 = vector.broadcast %5 : vector<1x256xf32> to vector<8x256xf32>
    %13 = arith.addf %11, %12 : vector<8x256xf32>
    %cst_9 = arith.constant 0.000000e+00 : f32
    %14 = vector.broadcast %cst_9 : f32 to vector<8x256xf32>
    %15 = arith.maximumf %13, %14 : vector<8x256xf32>
    %c32 = arith.constant 32 : index
    %c0_10 = arith.constant 0 : index
    %16 = vector.load %arg2[%c32, %c0_10] : memref<416x256xbf16, #tpu.memory_space<vmem>>, vector<256x128xbf16>
    %c32_11 = arith.constant 32 : index
    %c128 = arith.constant 128 : index
    %17 = vector.load %arg2[%c32_11, %c128] : memref<416x256xbf16, #tpu.memory_space<vmem>>, vector<256x128xbf16>
    %c2 = arith.constant 2 : index
    %c0_12 = arith.constant 0 : index
    %18 = vector.load %arg3[%c2, %c0_12] : memref<8x256xf32, #tpu.memory_space<vmem>>, vector<1x128xf32>
    %c2_13 = arith.constant 2 : index
    %c128_14 = arith.constant 128 : index
    %19 = vector.load %arg3[%c2_13, %c128_14] : memref<8x256xf32, #tpu.memory_space<vmem>>, vector<1x128xf32>
    %20 = arith.truncf %10 : vector<8x256xf32> to vector<8x256xbf16>
    %cst_15 = arith.constant dense<0.000000e+00> : vector<8x128xf32>
    %21 = tpu.matmul %20, %16, %cst_15 {dimension_numbers = #tpu.dot_dimension_numbers<[1], [0], [0], [1], [0, 0, 1, 1], [], []>} : vector<8x256xbf16>, vector<256x128xbf16>, vector<8x128xf32> -> vector<8x128xf32>
    %22 = vector.broadcast %18 : vector<1x128xf32> to vector<8x128xf32>
    %23 = arith.addf %21, %22 : vector<8x128xf32>
    %cst_16 = arith.constant 0.000000e+00 : f32
    %24 = vector.broadcast %cst_16 : f32 to vector<8x128xf32>
    %25 = arith.maximumf %23, %24 : vector<8x128xf32>
    %26 = arith.truncf %15 : vector<8x256xf32> to vector<8x256xbf16>
    %cst_17 = arith.constant dense<0.000000e+00> : vector<8x128xf32>
    %27 = tpu.matmul %26, %17, %cst_17 {dimension_numbers = #tpu.dot_dimension_numbers<[1], [0], [0], [1], [0, 0, 1, 1], [], []>} : vector<8x256xbf16>, vector<256x128xbf16>, vector<8x128xf32> -> vector<8x128xf32>
    %28 = vector.broadcast %19 : vector<1x128xf32> to vector<8x128xf32>
    %29 = arith.addf %27, %28 : vector<8x128xf32>
    %cst_18 = arith.constant 0.000000e+00 : f32
    %30 = vector.broadcast %cst_18 : f32 to vector<8x128xf32>
    %31 = arith.maximumf %29, %30 : vector<8x128xf32>
    %c288 = arith.constant 288 : index
    %c0_19 = arith.constant 0 : index
    %32 = vector.load %arg2[%c288, %c0_19] : memref<416x256xbf16, #tpu.memory_space<vmem>>, vector<128x128xbf16>
    %c288_20 = arith.constant 288 : index
    %c128_21 = arith.constant 128 : index
    %33 = vector.load %arg2[%c288_20, %c128_21] : memref<416x256xbf16, #tpu.memory_space<vmem>>, vector<128x128xbf16>
    %c3 = arith.constant 3 : index
    %c0_22 = arith.constant 0 : index
    %34 = vector.load %arg3[%c3, %c0_22] : memref<8x256xf32, #tpu.memory_space<vmem>>, vector<1x128xf32>
    %35 = arith.truncf %25 : vector<8x128xf32> to vector<8x128xbf16>
    %cst_23 = arith.constant dense<0.000000e+00> : vector<8x128xf32>
    %36 = tpu.matmul %35, %32, %cst_23 {dimension_numbers = #tpu.dot_dimension_numbers<[1], [0], [0], [1], [0, 0, 1, 1], [], []>} : vector<8x128xbf16>, vector<128x128xbf16>, vector<8x128xf32> -> vector<8x128xf32>
    %37 = arith.truncf %31 : vector<8x128xf32> to vector<8x128xbf16>
    %cst_24 = arith.constant dense<0.000000e+00> : vector<8x128xf32>
    %38 = tpu.matmul %37, %33, %cst_24 {dimension_numbers = #tpu.dot_dimension_numbers<[1], [0], [0], [1], [0, 0, 1, 1], [], []>} : vector<8x128xbf16>, vector<128x128xbf16>, vector<8x128xf32> -> vector<8x128xf32>
    %39 = arith.addf %36, %38 : vector<8x128xf32>
    %40 = vector.broadcast %34 : vector<1x128xf32> to vector<8x128xf32>
    %41 = arith.addf %39, %40 : vector<8x128xf32>
    %c0_25 = arith.constant 0 : index
    %c0_26 = arith.constant 0 : index
    %42 = vector.load %arg4[%c0_25, %c0_26] : memref<8x128xf32, #tpu.memory_space<vmem>>, vector<8x128xf32>
    tpu.vector_store %arg4[%c0_25, %c0_26], %41 {strides = array<i32>} : memref<8x128xf32, #tpu.memory_space<vmem>>, vector<8x128xf32>,
    return
  }
  func.func @transform_0(%arg0: i32) -> (i32, i32) {
    %c0_i32 = arith.constant 0 : i32
    %c0_i32_0 = arith.constant 0 : i32
    return %arg0, %c0_i32 : i32, i32
  }
  func.func @transform_1(%arg0: i32) -> (i32, i32) {
    %c0_i32 = arith.constant 0 : i32
    %c0_i32_0 = arith.constant 0 : i32
    %c0_i32_1 = arith.constant 0 : i32
    return %c0_i32, %c0_i32_0 : i32, i32
  }
  func.func @transform_2(%arg0: i32) -> (i32, i32) {
    %c0_i32 = arith.constant 0 : i32
    %c0_i32_0 = arith.constant 0 : i32
    %c0_i32_1 = arith.constant 0 : i32
    return %c0_i32, %c0_i32_0 : i32, i32
  }
  func.func @transform_3(%arg0: i32) -> (i32, i32) {
    %c0_i32 = arith.constant 0 : i32
    %c0_i32_0 = arith.constant 0 : i32
    return %arg0, %c0_i32 : i32, i32
  }
}

</mosaic_0001>

<llo_original>
// kernel: tpu_custom_call.1
$region0: #{tpu_custom_call.1}
  #allocation0 [shape = 'u32[]', space=smem, size = 0x4, offset = 0x4, fixed_abs, tag = 'smem constant byte address 0x4 - core index']
  #allocation1 [shape = 'u32[144,128]{1,0:T(1,128)}', space=vmem, size = 0x12000, scoped, tag = 'internal scratch']
  %s0 = inlined_call_operand.hbm [shape: f32[8,16], index: 0, kind: input, shape index: {}]
  %s1 = inlined_call_operand.hbm [shape: bf16[416,256], index: 1, kind: input, shape index: {}]
  %s2 = inlined_call_operand.hbm [shape: f32[8,256], index: 2, kind: input, shape index: {}]
  %s3 = inlined_call_operand.hbm [shape: f32[8,128], index: 3, kind: output, shape index: {}]
  %s4 = sld [smem:[#allocation0]]
  $region34: #{tpu_custom_call.1} parent=0
    _
  %s6 = ssub.s32 1, %s4
  %s7 = scalar_select 0, %s6, %s4
  $region1: #{tpu_custom_call.1} parent=0
    #allocation2 [shape = 'u8[4096]{0}', space=vmem, size = 0x1000, scoped, tag = 'input window, operand 0, single buffered']
    #allocation3 [shape = 's32[1]{0}', space=sflag, size = 0x4, scoped, tag = 'scoped memory for tpu_custom_call.1']
    #allocation4 [shape = 's32[1]{0}', space=sflag, size = 0x4, scoped, tag = 'scoped memory for tpu_custom_call.1']
    #allocation5 [shape = 'u8[212992]{0}', space=vmem, size = 0x34000, scoped, tag = 'input window, operand 1, single buffered']
    #allocation6 [shape = 's32[1]{0}', space=sflag, size = 0x4, scoped, tag = 'scoped memory for tpu_custom_call.1']
    #allocation7 [shape = 'u8[8192]{0}', space=vmem, size = 0x2000, scoped, tag = 'input window, operand 2, single buffered']
    #allocation8 [shape = 'u8[4096]{0}', space=vmem, size = 0x1000, scoped, tag = 'output window, operand 0, single buffered']
    %8 = vsyncpa [#allocation3], 0
    %9 = vsyncpa [#allocation6], 0
    %10 = vsyncpa [#allocation4], 0
    // Predicated region
    $region2: #{tpu_custom_call.1} parent=1 // pred_check
      _
    $region3: #{tpu_custom_call.1} parent=1 // pred_check_branch
      %12 = sbr.rel (0) target = $region5
    $region4: #{tpu_custom_call.1} parent=1 // pred_region
      %s14 = ssub.s32 128, 128
      %15 = vsyncadd [#allocation3], %s14
      %s17 = sshll.u32 [#allocation2], 4
      %s18 = int_to_ptr.vmem [resolvable:$true] %s17
      %20 = dma.hbm_to_vmem [thread:$0]  %s0, 128, %s18, [#allocation3]
    $region5: #{tpu_custom_call.1} parent=1 // pred_fallthru
      _
    // Predicated region
    $region6: #{tpu_custom_call.1} parent=1 // pred_check
      _
    $region7: #{tpu_custom_call.1} parent=1 // pred_check_branch
      %22 = sbr.rel (0) target = $region9
    $region8: #{tpu_custom_call.1} parent=1 // pred_region
      %s24 = ssub.s32 6656, 6656
      %25 = vsyncadd [#allocation6], %s24
      %s26 = sshll.u32 [#allocation5], 4
      %s27 = int_to_ptr.vmem [resolvable:$true] %s26
      %32 = dma.hbm_to_vmem [thread:$0]  %s1, 6656, %s27, [#allocation6], 128, 128, 8
    $region9: #{tpu_custom_call.1} parent=1 // pred_fallthru
      _
    // Predicated region
    $region10: #{tpu_custom_call.1} parent=1 // pred_check
      _
    $region11: #{tpu_custom_call.1} parent=1 // pred_check_branch
      %34 = sbr.rel (0) target = $region13
    $region12: #{tpu_custom_call.1} parent=1 // pred_region
      %s36 = ssub.s32 256, 256
      %37 = vsyncadd [#allocation6], %s36
      %s39 = sshll.u32 [#allocation7], 4
      %s40 = int_to_ptr.vmem [resolvable:$true] %s39
      %42 = dma.hbm_to_vmem [thread:$0]  %s2, 256, %s40, [#allocation6]
    $region13: #{tpu_custom_call.1} parent=1 // pred_fallthru
      _
    // Predicated region
    $region14: #{tpu_custom_call.1} parent=1 // pred_check
      _
    $region15: #{tpu_custom_call.1} parent=1 // pred_check_branch
      %44 = sbr.rel (0) target = $region17
    $region16: #{tpu_custom_call.1} parent=1 // pred_region
      %45 = dma.done [#allocation3], 128
    $region17: #{tpu_custom_call.1} parent=1 // pred_fallthru
      _
    // Predicated region
    $region18: #{tpu_custom_call.1} parent=1 // pred_check
      _
    $region19: #{tpu_custom_call.1} parent=1 // pred_check_branch
      %47 = sbr.rel (0) target = $region21
    $region20: #{tpu_custom_call.1} parent=1 // pred_region
      %48 = dma.done [#allocation6], 6656
    $region21: #{tpu_custom_call.1} parent=1 // pred_fallthru
      _
    // Predicated region
    $region22: #{tpu_custom_call.1} parent=1 // pred_check
      _
    $region23: #{tpu_custom_call.1} parent=1 // pred_check_branch
      %50 = sbr.rel (0) target = $region25
    $region24: #{tpu_custom_call.1} parent=1 // pred_region
      %51 = dma.done [#allocation6], 256
    $region25: #{tpu_custom_call.1} parent=1 // pred_fallthru
      _
    %v53 = vld [vmem:[#allocation2] sm:$0xff]
    %v54 = vpack.c.bf16 %v53, %v53
    %v55 = vld [vmem:[#allocation5] sm:$0xff]
    %v56 = vld [vmem:[#allocation5 + $0x8] sm:$0xff]
    %v57 = vld [vmem:[#allocation5 + $0x10] sm:$0xff]
    %v58 = vld [vmem:[#allocation5 + $0x18] sm:$0xff]
    %v59 = vld [vmem:[#allocation7] ss:$8 sm:$0x3]
    %s60 = scalar_lea.vmem [#allocation7], 1
    %v61 = vld [vmem:[%s60] ss:$8 sm:$0x3]
    %v63 = vlaneseq
    %v64 = vshrl.u32 %v63, 7
    %v65 = vsub.s32 0, %v64
    %v66 = vrot.slane %v59, %v65
    %v67 = vlaneseq
    %v68 = vshrl.u32 %v67, 7
    %v69 = vsub.s32 1, %v68
    %v70 = vrot.slane %v59, %v69
    %v75 = vunpack.c.l.b16 %v55
    %v76 = vunpack.c.h.b16 %v55
    %v77 = vunpack.c.l.b16 %v56
    %v78 = vunpack.c.h.b16 %v56
    %v79 = vpack.c.b16 %v77, %v75
    %v80 = vpack.c.b16 %v78, %v76
    %vm83 = vcmask 130048
    %v85 = vsel %vm83, %v54, 0
    %87 = vmatprep.subr.bf16.mxu0 0
    %88 = vmatpush1.bf16.msra.mxu0 0
    %89 = vmatprep.subr.bf16.mxu0 0
    %90 = vmatpush1.bf16.msra.mxu0 0
    %91 = vmatprep.subr.bf16.mxu0 0
    %92 = vmatpush1.bf16.msra.mxu0 0
    %93 = vmatprep.subr.bf16.mxu0 0
    %94 = vmatpush1.bf16.msra.mxu0 0
    %95 = vmatprep.subr.bf16.mxu0 0
    %96 = vmatpush1.bf16.msra.mxu0 0
    %97 = vmatprep.subr.bf16.mxu0 0
    %98 = vmatpush1.bf16.msra.mxu0 0
    %99 = vmatprep.subr.bf16.mxu0 0
    %100 = vmatpush1.bf16.msra.mxu0 0
    %101 = vmatprep.subr.bf16.mxu0 %v80
    %102 = vmatpush1.bf16.msra.mxu0 %v79
    %103 = vmatprep.subr.bf16.mxu0 0
    %104 = vmatpush2.bf16.msra.mxu0 0
    %105 = vmatprep.subr.bf16.mxu0 0
    %106 = vmatpush2.bf16.msra.mxu0 0
    %107 = vmatprep.subr.bf16.mxu0 0
    %108 = vmatpush2.bf16.msra.mxu0 0
    %109 = vmatprep.subr.bf16.mxu0 0
    %110 = vmatpush2.bf16.msra.mxu0 0
    %111 = vmatprep.subr.bf16.mxu0 0
    %112 = vmatpush2.bf16.msra.mxu0 0
    %113 = vmatprep.subr.bf16.mxu0 0
    %114 = vmatpush2.bf16.msra.mxu0 0
    %115 = vmatprep.subr.bf16.mxu0 0
    %116 = vmatpush2.bf16.msra.mxu0 0
    %117 = vmatprep.subr.bf16.mxu0 0
    %118 = vmatpush2.bf16.msra.mxu0 0
    %119 = vmatprep.mubr.bf16.mxu0 0
    %120 = vmatmul.mubr.bf16.gmra.mxu0 %v85
    %v121 = vpop.f32.mrf.mxu0
    %v122 = vadd.f32 %v66, %v121
    %v123 = vpop.f32.mrf.mxu0
    %v124 = vadd.f32 %v70, %v123
    %v125 = vpop.f32.mrf.mxu0
    %v126 = vpop.f32.mrf.mxu0
    %127 = vdwg.mxu0
    %v128 = vmax.f32 %v122, 0.0
    %v129 = vmax.f32 %v124, 0.0
    %v131 = vlaneseq
    %v132 = vshrl.u32 %v131, 7
    %v133 = vsub.s32 0, %v132
    %v134 = vrot.slane %v61, %v133
    %v135 = vlaneseq
    %v136 = vshrl.u32 %v135, 7
    %v137 = vsub.s32 1, %v136
    %v138 = vrot.slane %v61, %v137
    %v143 = vunpack.c.l.b16 %v57
    %v144 = vunpack.c.h.b16 %v57
    %v145 = vunpack.c.l.b16 %v58
    %v146 = vunpack.c.h.b16 %v58
    %v147 = vpack.c.b16 %v145, %v143
    %v148 = vpack.c.b16 %v146, %v144
    %151 = vmatprep.subr.bf16.mxu0 0
    %152 = vmatpush1.bf16.msra.mxu0 0
    %153 = vmatprep.subr.bf16.mxu0 0
    %154 = vmatpush1.bf16.msra.mxu0 0
    %155 = vmatprep.subr.bf16.mxu0 0
    %156 = vmatpush1.bf16.msra.mxu0 0
    %157 = vmatprep.subr.bf16.mxu0 0
    %158 = vmatpush1.bf16.msra.mxu0 0
    %159 = vmatprep.subr.bf16.mxu0 0
    %160 = vmatpush1.bf16.msra.mxu0 0
    %161 = vmatprep.subr.bf16.mxu0 0
    %162 = vmatpush1.bf16.msra.mxu0 0
    %163 = vmatprep.subr.bf16.mxu0 0
    %164 = vmatpush1.bf16.msra.mxu0 0
    %165 = vmatprep.subr.bf16.mxu0 %v148
    %166 = vmatpush1.bf16.msra.mxu0 %v147
    %167 = vmatprep.subr.bf16.mxu0 0
    %168 = vmatpush2.bf16.msra.mxu0 0
    %169 = vmatprep.subr.bf16.mxu0 0
    %170 = vmatpush2.bf16.msra.mxu0 0
    %171 = vmatprep.subr.bf16.mxu0 0
    %172 = vmatpush2.bf16.msra.mxu0 0
    %173 = vmatprep.subr.bf16.mxu0 0
    %174 = vmatpush2.bf16.msra.mxu0 0
    %175 = vmatprep.subr.bf16.mxu0 0
    %176 = vmatpush2.bf16.msra.mxu0 0
    %177 = vmatprep.subr.bf16.mxu0 0
    %178 = vmatpush2.bf16.msra.mxu0 0
    %179 = vmatprep.subr.bf16.mxu0 0
    %180 = vmatpush2.bf16.msra.mxu0 0
    %181 = vmatprep.subr.bf16.mxu0 0
    %182 = vmatpush2.bf16.msra.mxu0 0
    %183 = vmatprep.mubr.bf16.mxu0 0
    %184 = vmatmul.mubr.bf16.gmra.mxu0 %v85
    %v185 = vpop.f32.mrf.mxu0
    %v186 = vadd.f32 %v134, %v185
    %v187 = vpop.f32.mrf.mxu0
    %v188 = vadd.f32 %v138, %v187
    %v189 = vpop.f32.mrf.mxu0
    %v190 = vpop.f32.mrf.mxu0
    %191 = vdwg.mxu0
    %v192 = vmax.f32 %v186, 0.0
    %v193 = vmax.f32 %v188, 0.0
    %v194 = vld [vmem:[#allocation5 + $0x20] sm:$0xf]
    %v195 = vld [vmem:[#allocation5 + $0x28] sm:$0xf]
    %v196 = vld [vmem:[#allocation5 + $0x30] sm:$0xf]
    %v197 = vld [vmem:[#allocation5 + $0x38] sm:$0xf]
    %v198 = vld [vmem:[#allocation5 + $0x40] sm:$0xf]
    %v199 = vld [vmem:[#allocation5 + $0x48] sm:$0xf]
    %v200 = vld [vmem:[#allocation5 + $0x50] sm:$0xf]
    %v201 = vld [vmem:[#allocation5 + $0x58] sm:$0xf]
    %v202 = vld [vmem:[#allocation5 + $0x60] sm:$0xf]
    %v203 = vld [vmem:[#allocation5 + $0x68] sm:$0xf]
    %v204 = vld [vmem:[#allocation5 + $0x70] sm:$0xf]
    %v205 = vld [vmem:[#allocation5 + $0x78] sm:$0xf]
    %v206 = vld [vmem:[#allocation5 + $0x80] sm:$0xf]
    %v207 = vld [vmem:[#allocation5 + $0x88] sm:$0xf]
    %v208 = vld [vmem:[#allocation5 + $0x90] sm:$0xf]
    %v209 = vld [vmem:[#allocation5 + $0x98] sm:$0xf]
    %v210 = vld [vmem:[#allocation5 + $0xa0] sm:$0xf]
    %v211 = vld [vmem:[#allocation5 + $0xa8] sm:$0xf]
    %v212 = vld [vmem:[#allocation5 + $0xb0] sm:$0xf]
    %v213 = vld [vmem:[#allocation5 + $0xb8] sm:$0xf]
    %v214 = vld [vmem:[#allocation5 + $0xc0] sm:$0xf]
    %v215 = vld [vmem:[#allocation5 + $0xc8] sm:$0xf]
    %v216 = vld [vmem:[#allocation5 + $0xd0] sm:$0xf]
    %v217 = vld [vmem:[#allocation5 + $0xd8] sm:$0xf]
    %v218 = vld [vmem:[#allocation5 + $0xe0] sm:$0xf]
    %v219 = vld [vmem:[#allocation5 + $0xe8] sm:$0xf]
    %v220 = vld [vmem:[#allocation5 + $0xf0] sm:$0xf]
    %v221 = vld [vmem:[#allocation5 + $0xf8] sm:$0xf]
    %v222 = vld [vmem:[#allocation5 + $0x100] sm:$0xf]
    %v223 = vld [vmem:[#allocation5 + $0x108] sm:$0xf]
    %v224 = vld [vmem:[#allocation5 + $0x110] sm:$0xf]
    %v225 = vld [vmem:[#allocation5 + $0x118] sm:$0xf]
    %v226 = vld [vmem:[#allocation5 + $0x24] sm:$0xf]
    %v227 = vld [vmem:[#allocation5 + $0x2c] sm:$0xf]
    %v228 = vld [vmem:[#allocation5 + $0x34] sm:$0xf]
    %v229 = vld [vmem:[#allocation5 + $0x3c] sm:$0xf]
    %v230 = vld [vmem:[#allocation5 + $0x44] sm:$0xf]
    %v231 = vld [vmem:[#allocation5 + $0x4c] sm:$0xf]
    %v232 = vld [vmem:[#allocation5 + $0x54] sm:$0xf]
    %v233 = vld [vmem:[#allocation5 + $0x5c] sm:$0xf]
    %v234 = vld [vmem:[#allocation5 + $0x64] sm:$0xf]
    %v235 = vld [vmem:[#allocation5 + $0x6c] sm:$0xf]
    %v236 = vld [vmem:[#allocation5 + $0x74] sm:$0xf]
    %v237 = vld [vmem:[#allocation5 + $0x7c] sm:$0xf]
    %v238 = vld [vmem:[#allocation5 + $0x84] sm:$0xf]
    %v239 = vld [vmem:[#allocation5 + $0x8c] sm:$0xf]
    %v240 = vld [vmem:[#allocation5 + $0x94] sm:$0xf]
    %v241 = vld [vmem:[#allocation5 + $0x9c] sm:$0xf]
    %v242 = vld [vmem:[#allocation5 + $0xa4] sm:$0xf]
    %v243 = vld [vmem:[#allocation5 + $0xac] sm:$0xf]
    %v244 = vld [vmem:[#allocation5 + $0xb4] sm:$0xf]
    %v245 = vld [vmem:[#allocation5 + $0xbc] sm:$0xf]
    %v246 = vld [vmem:[#allocation5 + $0xc4] sm:$0xf]
    %v247 = vld [vmem:[#allocation5 + $0xcc] sm:$0xf]
    %v248 = vld [vmem:[#allocation5 + $0xd4] sm:$0xf]
    %v249 = vld [vmem:[#allocation5 + $0xdc] sm:$0xf]
    %v250 = vld [vmem:[#allocation5 + $0xe4] sm:$0xf]
    %v251 = vld [vmem:[#allocation5 + $0xec] sm:$0xf]
    %v252 = vld [vmem:[#allocation5 + $0xf4] sm:$0xf]
    %v253 = vld [vmem:[#allocation5 + $0xfc] sm:$0xf]
    %v254 = vld [vmem:[#allocation5 + $0x104] sm:$0xf]
    %v255 = vld [vmem:[#allocation5 + $0x10c] sm:$0xf]
    %v256 = vld [vmem:[#allocation5 + $0x114] sm:$0xf]
    %v257 = vld [vmem:[#allocation5 + $0x11c] sm:$0xf]
    %v258 = vld [vmem:[#allocation7 + $0x2] ss:$0 sm:$0xff]
    %v259 = vld [vmem:[#allocation7 + $0xa] ss:$0 sm:$0xff]
    %v260 = vpack.c.bf16 %v128, %v128
    %v261 = vpack.c.bf16 %v129, %v129
    %v294 = vunpack.c.l.b16 %v194
    %v295 = vunpack.c.l.b16 %v195
    %v296 = vunpack.c.l.b16 %v196
    %v297 = vunpack.c.l.b16 %v197
    %v298 = vunpack.c.l.b16 %v198
    %v299 = vunpack.c.l.b16 %v199
    %v300 = vunpack.c.l.b16 %v200
    %v301 = vunpack.c.l.b16 %v201
    %v302 = vunpack.c.l.b16 %v202
    %v303 = vunpack.c.l.b16 %v203
    %v304 = vunpack.c.l.b16 %v204
    %v305 = vunpack.c.l.b16 %v205
    %v306 = vunpack.c.l.b16 %v206
    %v307 = vunpack.c.l.b16 %v207
    %v308 = vunpack.c.l.b16 %v208
    %v309 = vunpack.c.l.b16 %v209
    %v310 = vunpack.c.l.b16 %v210
    %v311 = vunpack.c.l.b16 %v211
    %v312 = vunpack.c.l.b16 %v212
    %v313 = vunpack.c.l.b16 %v213
    %v314 = vunpack.c.l.b16 %v214
    %v315 = vunpack.c.l.b16 %v215
    %v316 = vunpack.c.l.b16 %v216
    %v317 = vunpack.c.l.b16 %v217
    %v318 = vunpack.c.l.b16 %v218
    %v319 = vunpack.c.l.b16 %v219
    %v320 = vunpack.c.l.b16 %v220
    %v321 = vunpack.c.l.b16 %v221
    %v322 = vunpack.c.l.b16 %v222
    %v323 = vunpack.c.l.b16 %v223
    %v324 = vunpack.c.l.b16 %v224
    %v325 = vunpack.c.l.b16 %v225
    %v326 = vpack.c.b16 %v295, %v294
    %v327 = vpack.c.b16 %v297, %v296
    %v328 = vpack.c.b16 %v299, %v298
    %v329 = vpack.c.b16 %v301, %v300
    %v330 = vpack.c.b16 %v303, %v302
    %v331 = vpack.c.b16 %v305, %v304
    %v332 = vpack.c.b16 %v307, %v306
    %v333 = vpack.c.b16 %v309, %v308
    %v334 = vpack.c.b16 %v311, %v310
    %v335 = vpack.c.b16 %v313, %v312
    %v336 = vpack.c.b16 %v315, %v314
    %v337 = vpack.c.b16 %v317, %v316
    %v338 = vpack.c.b16 %v319, %v318
    %v339 = vpack.c.b16 %v321, %v320
    %v340 = vpack.c.b16 %v323, %v322
    %v341 = vpack.c.b16 %v325, %v324
    %358 = vmatprep.subr.bf16.mxu0 0
    %359 = vmatpush1.bf16.msra.mxu0 %v333
    %360 = vmatprep.subr.bf16.mxu0 0
    %361 = vmatpush1.bf16.msra.mxu0 %v332
    %362 = vmatprep.subr.bf16.mxu0 0
    %363 = vmatpush1.bf16.msra.mxu0 %v331
    %364 = vmatprep.subr.bf16.mxu0 0
    %365 = vmatpush1.bf16.msra.mxu0 %v330
    %366 = vmatprep.subr.bf16.mxu0 0
    %367 = vmatpush1.bf16.msra.mxu0 %v329
    %368 = vmatprep.subr.bf16.mxu0 0
    %369 = vmatpush1.bf16.msra.mxu0 %v328
    %370 = vmatprep.subr.bf16.mxu0 0
    %371 = vmatpush1.bf16.msra.mxu0 %v327
    %372 = vmatprep.subr.bf16.mxu0 0
    %373 = vmatpush1.bf16.msra.mxu0 %v326
    %374 = vmatprep.subr.bf16.mxu0 0
    %375 = vmatpush2.bf16.msra.mxu0 %v341
    %376 = vmatprep.subr.bf16.mxu0 0
    %377 = vmatpush2.bf16.msra.mxu0 %v340
    %378 = vmatprep.subr.bf16.mxu0 0
    %379 = vmatpush2.bf16.msra.mxu0 %v339
    %380 = vmatprep.subr.bf16.mxu0 0
    %381 = vmatpush2.bf16.msra.mxu0 %v338
    %382 = vmatprep.subr.bf16.mxu0 0
    %383 = vmatpush2.bf16.msra.mxu0 %v337
    %384 = vmatprep.subr.bf16.mxu0 0
    %385 = vmatpush2.bf16.msra.mxu0 %v336
    %386 = vmatprep.subr.bf16.mxu0 0
    %387 = vmatpush2.bf16.msra.mxu0 %v335
    %388 = vmatprep.subr.bf16.mxu0 0
    %389 = vmatpush2.bf16.msra.mxu0 %v334
    %390 = vmatprep.mubr.bf16.mxu0 %v261
    %391 = vmatmul.mubr.bf16.gmra.mxu0 %v260
    %v392 = vpop.f32.mrf.mxu0
    %v393 = vadd.f32 %v258, %v392
    %v394 = vpop.f32.mrf.mxu0
    %v395 = vpop.f32.mrf.mxu0
    %v396 = vpop.f32.mrf.mxu0
    %397 = vdwg.mxu0
    %v398 = vmax.f32 %v393, 0.0
    %v399 = vpack.c.bf16 %v192, %v192
    %v400 = vpack.c.bf16 %v193, %v193
    %v433 = vunpack.c.l.b16 %v226
    %v434 = vunpack.c.l.b16 %v227
    %v435 = vunpack.c.l.b16 %v228
    %v436 = vunpack.c.l.b16 %v229
    %v437 = vunpack.c.l.b16 %v230
    %v438 = vunpack.c.l.b16 %v231
    %v439 = vunpack.c.l.b16 %v232
    %v440 = vunpack.c.l.b16 %v233
    %v441 = vunpack.c.l.b16 %v234
    %v442 = vunpack.c.l.b16 %v235
    %v443 = vunpack.c.l.b16 %v236
    %v444 = vunpack.c.l.b16 %v237
    %v445 = vunpack.c.l.b16 %v238
    %v446 = vunpack.c.l.b16 %v239
    %v447 = vunpack.c.l.b16 %v240
    %v448 = vunpack.c.l.b16 %v241
    %v449 = vunpack.c.l.b16 %v242
    %v450 = vunpack.c.l.b16 %v243
    %v451 = vunpack.c.l.b16 %v244
    %v452 = vunpack.c.l.b16 %v245
    %v453 = vunpack.c.l.b16 %v246
    %v454 = vunpack.c.l.b16 %v247
    %v455 = vunpack.c.l.b16 %v248
    %v456 = vunpack.c.l.b16 %v249
    %v457 = vunpack.c.l.b16 %v250
    %v458 = vunpack.c.l.b16 %v251
    %v459 = vunpack.c.l.b16 %v252
    %v460 = vunpack.c.l.b16 %v253
    %v461 = vunpack.c.l.b16 %v254
    %v462 = vunpack.c.l.b16 %v255
    %v463 = vunpack.c.l.b16 %v256
    %v464 = vunpack.c.l.b16 %v257
    %v465 = vpack.c.b16 %v434, %v433
    %v466 = vpack.c.b16 %v436, %v435
    %v467 = vpack.c.b16 %v438, %v437
    %v468 = vpack.c.b16 %v440, %v439
    %v469 = vpack.c.b16 %v442, %v441
    %v470 = vpack.c.b16 %v444, %v443
    %v471 = vpack.c.b16 %v446, %v445
    %v472 = vpack.c.b16 %v448, %v447
    %v473 = vpack.c.b16 %v450, %v449
    %v474 = vpack.c.b16 %v452, %v451
    %v475 = vpack.c.b16 %v454, %v453
    %v476 = vpack.c.b16 %v456, %v455
    %v477 = vpack.c.b16 %v458, %v457
    %v478 = vpack.c.b16 %v460, %v459
    %v479 = vpack.c.b16 %v462, %v461
    %v480 = vpack.c.b16 %v464, %v463
    %497 = vmatprep.subr.bf16.mxu0 0
    %498 = vmatpush1.bf16.msra.mxu0 %v472
    %499 = vmatprep.subr.bf16.mxu0 0
    %500 = vmatpush1.bf16.msra.mxu0 %v471
    %501 = vmatprep.subr.bf16.mxu0 0
    %502 = vmatpush1.bf16.msra.mxu0 %v470
    %503 = vmatprep.subr.bf16.mxu0 0
    %504 = vmatpush1.bf16.msra.mxu0 %v469
    %505 = vmatprep.subr.bf16.mxu0 0
    %506 = vmatpush1.bf16.msra.mxu0 %v468
    %507 = vmatprep.subr.bf16.mxu0 0
    %508 = vmatpush1.bf16.msra.mxu0 %v467
    %509 = vmatprep.subr.bf16.mxu0 0
    %510 = vmatpush1.bf16.msra.mxu0 %v466
    %511 = vmatprep.subr.bf16.mxu0 0
    %512 = vmatpush1.bf16.msra.mxu0 %v465
    %513 = vmatprep.subr.bf16.mxu0 0
    %514 = vmatpush2.bf16.msra.mxu0 %v480
    %515 = vmatprep.subr.bf16.mxu0 0
    %516 = vmatpush2.bf16.msra.mxu0 %v479
    %517 = vmatprep.subr.bf16.mxu0 0
    %518 = vmatpush2.bf16.msra.mxu0 %v478
    %519 = vmatprep.subr.bf16.mxu0 0
    %520 = vmatpush2.bf16.msra.mxu0 %v477
    %521 = vmatprep.subr.bf16.mxu0 0
    %522 = vmatpush2.bf16.msra.mxu0 %v476
    %523 = vmatprep.subr.bf16.mxu0 0
    %524 = vmatpush2.bf16.msra.mxu0 %v475
    %525 = vmatprep.subr.bf16.mxu0 0
    %526 = vmatpush2.bf16.msra.mxu0 %v474
    %527 = vmatprep.subr.bf16.mxu0 0
    %528 = vmatpush2.bf16.msra.mxu0 %v473
    %529 = vmatprep.mubr.bf16.mxu0 %v400
    %530 = vmatmul.mubr.bf16.gmra.mxu0 %v399
    %v531 = vpop.f32.mrf.mxu0
    %v532 = vadd.f32 %v259, %v531
    %v533 = vpop.f32.mrf.mxu0
    %v534 = vpop.f32.mrf.mxu0
    %v535 = vpop.f32.mrf.mxu0
    %536 = vdwg.mxu0
    %v537 = vmax.f32 %v532, 0.0
    %v538 = vld [vmem:[#allocation5 + $0x120] sm:$0xf]
    %v539 = vld [vmem:[#allocation5 + $0x128] sm:$0xf]
    %v540 = vld [vmem:[#allocation5 + $0x130] sm:$0xf]
    %v541 = vld [vmem:[#allocation5 + $0x138] sm:$0xf]
    %v542 = vld [vmem:[#allocation5 + $0x140] sm:$0xf]
    %v543 = vld [vmem:[#allocation5 + $0x148] sm:$0xf]
    %v544 = vld [vmem:[#allocation5 + $0x150] sm:$0xf]
    %v545 = vld [vmem:[#allocation5 + $0x158] sm:$0xf]
    %v546 = vld [vmem:[#allocation5 + $0x160] sm:$0xf]
    %v547 = vld [vmem:[#allocation5 + $0x168] sm:$0xf]
    %v548 = vld [vmem:[#allocation5 + $0x170] sm:$0xf]
    %v549 = vld [vmem:[#allocation5 + $0x178] sm:$0xf]
    %v550 = vld [vmem:[#allocation5 + $0x180] sm:$0xf]
    %v551 = vld [vmem:[#allocation5 + $0x188] sm:$0xf]
    %v552 = vld [vmem:[#allocation5 + $0x190] sm:$0xf]
    %v553 = vld [vmem:[#allocation5 + $0x198] sm:$0xf]
    %v554 = vld [vmem:[#allocation5 + $0x124] sm:$0xf]
    %v555 = vld [vmem:[#allocation5 + $0x12c] sm:$0xf]
    %v556 = vld [vmem:[#allocation5 + $0x134] sm:$0xf]
    %v557 = vld [vmem:[#allocation5 + $0x13c] sm:$0xf]
    %v558 = vld [vmem:[#allocation5 + $0x144] sm:$0xf]
    %v559 = vld [vmem:[#allocation5 + $0x14c] sm:$0xf]
    %v560 = vld [vmem:[#allocation5 + $0x154] sm:$0xf]
    %v561 = vld [vmem:[#allocation5 + $0x15c] sm:$0xf]
    %v562 = vld [vmem:[#allocation5 + $0x164] sm:$0xf]
    %v563 = vld [vmem:[#allocation5 + $0x16c] sm:$0xf]
    %v564 = vld [vmem:[#allocation5 + $0x174] sm:$0xf]
    %v565 = vld [vmem:[#allocation5 + $0x17c] sm:$0xf]
    %v566 = vld [vmem:[#allocation5 + $0x184] sm:$0xf]
    %v567 = vld [vmem:[#allocation5 + $0x18c] sm:$0xf]
    %v568 = vld [vmem:[#allocation5 + $0x194] sm:$0xf]
    %v569 = vld [vmem:[#allocation5 + $0x19c] sm:$0xf]
    %v570 = vld [vmem:[#allocation7 + $0x3] ss:$0 sm:$0xff]
    %v571 = vpack.c.bf16 %v398, %v398
    %v572 = vpack.c.bf16 %v537, %v537
    %v589 = vunpack.c.l.b16 %v554
    %v590 = vunpack.c.l.b16 %v555
    %v591 = vunpack.c.l.b16 %v556
    %v592 = vunpack.c.l.b16 %v557
    %v593 = vunpack.c.l.b16 %v558
    %v594 = vunpack.c.l.b16 %v559
    %v595 = vunpack.c.l.b16 %v560
    %v596 = vunpack.c.l.b16 %v561
    %v597 = vunpack.c.l.b16 %v562
    %v598 = vunpack.c.l.b16 %v563
    %v599 = vunpack.c.l.b16 %v564
    %v600 = vunpack.c.l.b16 %v565
    %v601 = vunpack.c.l.b16 %v566
    %v602 = vunpack.c.l.b16 %v567
    %v603 = vunpack.c.l.b16 %v568
    %v604 = vunpack.c.l.b16 %v569
    %v605 = vpack.c.b16 %v590, %v589
    %v606 = vpack.c.b16 %v592, %v591
    %v607 = vpack.c.b16 %v594, %v593
    %v608 = vpack.c.b16 %v596, %v595
    %v609 = vpack.c.b16 %v598, %v597
    %v610 = vpack.c.b16 %v600, %v599
    %v611 = vpack.c.b16 %v602, %v601
    %v612 = vpack.c.b16 %v604, %v603
    %621 = vmatprep.subr.bf16.mxu0 0
    %622 = vmatpush1.bf16.msra.mxu0 %v612
    %623 = vmatprep.subr.bf16.mxu0 0
    %624 = vmatpush1.bf16.msra.mxu0 %v611
    %625 = vmatprep.subr.bf16.mxu0 0
    %626 = vmatpush1.bf16.msra.mxu0 %v610
    %627 = vmatprep.subr.bf16.mxu0 0
    %628 = vmatpush1.bf16.msra.mxu0 %v609
    %629 = vmatprep.subr.bf16.mxu0 0
    %630 = vmatpush1.bf16.msra.mxu0 %v608
    %631 = vmatprep.subr.bf16.mxu0 0
    %632 = vmatpush1.bf16.msra.mxu0 %v607
    %633 = vmatprep.subr.bf16.mxu0 0
    %634 = vmatpush1.bf16.msra.mxu0 %v606
    %635 = vmatprep.subr.bf16.mxu0 0
    %636 = vmatpush1.bf16.msra.mxu0 %v605
    %637 = vmatprep.subr.bf16.mxu0 0
    %638 = vmatpush2.bf16.msra.mxu0 0
    %639 = vmatprep.subr.bf16.mxu0 0
    %640 = vmatpush2.bf16.msra.mxu0 0
    %641 = vmatprep.subr.bf16.mxu0 0
    %642 = vmatpush2.bf16.msra.mxu0 0
    %643 = vmatprep.subr.bf16.mxu0 0
    %644 = vmatpush2.bf16.msra.mxu0 0
    %645 = vmatprep.subr.bf16.mxu0 0
    %646 = vmatpush2.bf16.msra.mxu0 0
    %647 = vmatprep.subr.bf16.mxu0 0
    %648 = vmatpush2.bf16.msra.mxu0 0
    %649 = vmatprep.subr.bf16.mxu0 0
    %650 = vmatpush2.bf16.msra.mxu0 0
    %651 = vmatprep.subr.bf16.mxu0 0
    %652 = vmatpush2.bf16.msra.mxu0 0
    %653 = vmatprep.mubr.bf16.mxu0 0
    %654 = vmatmul.mubr.bf16.gmra.mxu0 %v572
    %v655 = vpop.f32.mrf.mxu0
    %v656 = vadd.f32 0.0, %v655
    %v657 = vpop.f32.mrf.mxu0
    %v658 = vpop.f32.mrf.mxu0
    %v659 = vpop.f32.mrf.mxu0
    %660 = vdwg.mxu0
    %v677 = vunpack.c.l.b16 %v538
    %v678 = vunpack.c.l.b16 %v539
    %v679 = vunpack.c.l.b16 %v540
    %v680 = vunpack.c.l.b16 %v541
    %v681 = vunpack.c.l.b16 %v542
    %v682 = vunpack.c.l.b16 %v543
    %v683 = vunpack.c.l.b16 %v544
    %v684 = vunpack.c.l.b16 %v545
    %v685 = vunpack.c.l.b16 %v546
    %v686 = vunpack.c.l.b16 %v547
    %v687 = vunpack.c.l.b16 %v548
    %v688 = vunpack.c.l.b16 %v549
    %v689 = vunpack.c.l.b16 %v550
    %v690 = vunpack.c.l.b16 %v551
    %v691 = vunpack.c.l.b16 %v552
    %v692 = vunpack.c.l.b16 %v553
    %v693 = vpack.c.b16 %v678, %v677
    %v694 = vpack.c.b16 %v680, %v679
    %v695 = vpack.c.b16 %v682, %v681
    %v696 = vpack.c.b16 %v684, %v683
    %v697 = vpack.c.b16 %v686, %v685
    %v698 = vpack.c.b16 %v688, %v687
    %v699 = vpack.c.b16 %v690, %v689
    %v700 = vpack.c.b16 %v692, %v691
    %709 = vmatprep.subr.bf16.mxu0 0
    %710 = vmatpush1.bf16.msra.mxu0 %v700
    %711 = vmatprep.subr.bf16.mxu0 0
    %712 = vmatpush1.bf16.msra.mxu0 %v699
    %713 = vmatprep.subr.bf16.mxu0 0
    %714 = vmatpush1.bf16.msra.mxu0 %v698
    %715 = vmatprep.subr.bf16.mxu0 0
    %716 = vmatpush1.bf16.msra.mxu0 %v697
    %717 = vmatprep.subr.bf16.mxu0 0
    %718 = vmatpush1.bf16.msra.mxu0 %v696
    %719 = vmatprep.subr.bf16.mxu0 0
    %720 = vmatpush1.bf16.msra.mxu0 %v695
    %721 = vmatprep.subr.bf16.mxu0 0
    %722 = vmatpush1.bf16.msra.mxu0 %v694
    %723 = vmatprep.subr.bf16.mxu0 0
    %724 = vmatpush1.bf16.msra.mxu0 %v693
    %725 = vmatprep.subr.bf16.mxu0 0
    %726 = vmatpush2.bf16.msra.mxu0 0
    %727 = vmatprep.subr.bf16.mxu0 0
    %728 = vmatpush2.bf16.msra.mxu0 0
    %729 = vmatprep.subr.bf16.mxu0 0
    %730 = vmatpush2.bf16.msra.mxu0 0
    %731 = vmatprep.subr.bf16.mxu0 0
    %732 = vmatpush2.bf16.msra.mxu0 0
    %733 = vmatprep.subr.bf16.mxu0 0
    %734 = vmatpush2.bf16.msra.mxu0 0
    %735 = vmatprep.subr.bf16.mxu0 0
    %736 = vmatpush2.bf16.msra.mxu0 0
    %737 = vmatprep.subr.bf16.mxu0 0
    %738 = vmatpush2.bf16.msra.mxu0 0
    %739 = vmatprep.subr.bf16.mxu0 0
    %740 = vmatpush2.bf16.msra.mxu0 0
    %741 = vmatprep.mubr.bf16.mxu0 0
    %742 = vmatmul.mubr.bf16.gmra.mxu0 %v571
    %v743 = vpop.f32.mrf.mxu0
    %v744 = vadd.f32 %v656, %v743
    %v745 = vpop.f32.mrf.mxu0
    %v746 = vpop.f32.mrf.mxu0
    %v747 = vpop.f32.mrf.mxu0
    %748 = vdwg.mxu0
    %v749 = vadd.f32 %v744, %v570
    %750 = vst [vmem:[#allocation8] sm:$0xff] %v749
    // Predicated region
    $region26: #{tpu_custom_call.1} parent=1 // pred_check
      _
    $region27: #{tpu_custom_call.1} parent=1 // pred_check_branch
      %752 = sbr.rel (0) target = $region29
    $region28: #{tpu_custom_call.1} parent=1 // pred_region
      %s754 = ssub.s32 128, 128
      %755 = vsyncadd [#allocation4], %s754
      %s757 = sshll.u32 [#allocation8], 4
      %s758 = int_to_ptr.vmem [resolvable:$true] %s757
      %760 = dma.vmem_to_hbm [thread:$0]  %s758, 128, %s3, [#allocation4]
    $region29: #{tpu_custom_call.1} parent=1 // pred_fallthru
      _
    // Predicated region
    $region30: #{tpu_custom_call.1} parent=1 // pred_check
      _
    $region31: #{tpu_custom_call.1} parent=1 // pred_check_branch
      %762 = sbr.rel (0) target = $region33
    $region32: #{tpu_custom_call.1} parent=1 // pred_region
      %763 = dma.done [#allocation4], 128
    $region33: #{tpu_custom_call.1} parent=1 // pred_fallthru
      _
    %764 = vsyncpa [#allocation3], 1
    %765 = vsyncpa [#allocation6], 1
    %766 = vsyncpa [#allocation4], 1

</llo_original>
